<compile_context>
chip_gen: v7x
topology: tpu7x:2x2x1
jax: 0.10.0
libtpu: 0.0.40
codegen_flags: <defaults>
</compile_context>

<pallas_src>
import jax
import jax.numpy as jnp
from jax.experimental import pallas as pl
from jax.experimental.pallas import tpu as pltpu


def _identity_kernel(x_ref, o_ref):
    # Whole-tile copy: load the current VMEM block and store it unchanged.
    o_ref[...] = x_ref[...]


_TARGET_TILE_BYTES = 2 << 20      # ~2 MiB per tile (byte-based, dtype-agnostic)
_TWO_CORE_SPLIT_BYTES = 1 << 20   # mid-size threshold for v7x 2-TC split


def _tile_sizes(M: int, N: int, itemsize: int):
    """Pick (tm, tn): multiple of (8,128) or full extent, ~2 MiB per tile."""
    total_bytes = M * N * itemsize

    if total_bytes <= _TARGET_TILE_BYTES:
        # Single-block fast path: exactly one input DMA and one output DMA.
        # For mid-size arrays, hand v7x's two TensorCores one block each.
        if total_bytes > _TWO_CORE_SPLIT_BYTES and M % 16 == 0:
            return M // 2, N
        return M, N

    # Only tile the minor dim if it is 128-aligned (legal for partial blocks)
    # and even an 8-row stripe of the full width would blow the byte target.
    if N % 128 == 0 and N * itemsize * 8 > _TARGET_TILE_BYTES:
        tn = max(128, ((_TARGET_TILE_BYTES // (8 * itemsize)) // 128) * 128)
        tn = min(tn, N)
    else:
        tn = N

    # Byte-based row tiling: multiple of 8 rows, ~target bytes per tile.
    rows = max(8, _TARGET_TILE_BYTES // (tn * itemsize))
    tm = (rows // 8) * 8
    tm = min(tm, M)
    return tm, tn


def identity(x: jax.Array) -> jax.Array:
    """Pallas identity: returns x unchanged (same shape/dtype, same values)."""
    orig_shape = x.shape
    dtype = x.dtype
    total = x.size

    if total == 0:
        return x

    # Layout-preserving flatten: collapse leading dims only, keep the natural
    # minor dim so no XLA relayout copies are introduced around the kernel.
    if x.ndim >= 2:
        N = orig_shape[-1]
        M = total // N
    elif total % 128 == 0:
        # 1-D (or scalar) arrays: a (total//128, 128) view is also row-major
        # layout-preserving and keeps stores lane-dense.
        M, N = total // 128, 128
    else:
        M, N = 1, total
    x2 = x.reshape(M, N)

    itemsize = jnp.dtype(dtype).itemsize
    tm, tn = _tile_sizes(M, N, itemsize)
    grid = (pl.cdiv(M, tm), pl.cdiv(N, tn))

    out2 = pl.pallas_call(
        _identity_kernel,
        out_shape=jax.ShapeDtypeStruct((M, N), dtype),
        grid=grid,
        in_specs=[pl.BlockSpec((tm, tn), lambda i, j: (i, j))],
        out_specs=pl.BlockSpec((tm, tn), lambda i, j: (i, j)),
        compiler_params=pltpu.CompilerParams(
            dimension_semantics=("parallel", "parallel"),
        ),
    )(x2)

    return out2.reshape(orig_shape)


if __name__ == "__main__":
    key = jax.random.PRNGKey(0)
    # Small NCHW-style input consistent with a conv-model context.
    x = jax.random.normal(key, (2, 4, 16, 16), dtype=jnp.float32)

    y = identity(x)
    jax.block_until_ready(y)

    assert y.shape == x.shape, (y.shape, x.shape)
    assert y.dtype == x.dtype, (y.dtype, x.dtype)
    assert bool(jnp.all(y == x)), "identity kernel output mismatch"

    print("KERNEL_OK")
</pallas_src>

<mosaic_0001>
module attributes {stable_mosaic.version = 11 : i64} {
  func.func @_identity_kernel(%arg0: i32, %arg1: i32, %arg2: memref<128x16xf32, #tpu.memory_space<vmem>>, %arg3: memref<128x16xf32, #tpu.memory_space<vmem>>) attributes {dimension_semantics = [#tpu.dimension_semantics<parallel>, #tpu.dimension_semantics<parallel>], iteration_bounds = array<i64: 1, 1>, scalar_prefetch = 0 : i64, scratch_operands = 0 : i64, tpu.core_type = #tpu.core_type<tc>, window_params = [{transform_indices = @transform_0, window_bounds = array<i64: 128, 16>}, {transform_indices = @transform_1, window_bounds = array<i64: 128, 16>}]} {
    %c0 = arith.constant 0 : index
    %c0_0 = arith.constant 0 : index
    %0 = vector.load %arg2[%c0, %c0_0] : memref<128x16xf32, #tpu.memory_space<vmem>>, vector<128x16xf32>
    %c0_1 = arith.constant 0 : index
    %c0_2 = arith.constant 0 : index
    %1 = vector.load %arg3[%c0_1, %c0_2] : memref<128x16xf32, #tpu.memory_space<vmem>>, vector<128x16xf32>
    tpu.vector_store %arg3[%c0_1, %c0_2], %0 {strides = array<i32>} : memref<128x16xf32, #tpu.memory_space<vmem>>, vector<128x16xf32>,
    return
  }
  func.func @transform_0(%arg0: i32, %arg1: i32) -> (i32, i32) {
    %c0_i32 = arith.constant 0 : i32
    return %arg0, %arg1 : i32, i32
  }
  func.func @transform_1(%arg0: i32, %arg1: i32) -> (i32, i32) {
    %c0_i32 = arith.constant 0 : i32
    return %arg0, %arg1 : i32, i32
  }
}

</mosaic_0001>

<llo_original>
// kernel: tpu_custom_call.1
$region0: #{tpu_custom_call.1}
  #allocation0 [shape = 'u32[]', space=smem, size = 0x4, offset = 0x4, fixed_abs, tag = 'smem constant byte address 0x4 - core index']
  #allocation1 [shape = 'u32[144,128]{1,0:T(1,128)}', space=vmem, size = 0x12000, scoped, tag = 'internal scratch']
  %s0 = inlined_call_operand.vmem [shape: f32[128,16], index: 0, kind: input, shape index: {}]
  %s1 = inlined_call_operand.vmem [shape: f32[128,16], index: 1, kind: output, shape index: {}]
  %s2 = sld [smem:[#allocation0]]
  $region14: #{tpu_custom_call.1} parent=0
    _
  %s4 = ssub.s32 1, %s2
  %s5 = scalar_select 0, %s4, %s2
  // Predicated region
  $region2: #{tpu_custom_call.1} parent=0 // pred_check
    _
  $region3: #{tpu_custom_call.1} parent=0 // pred_check_branch
    %7 = sbr.rel (0) target = $region5
  $region4: #{tpu_custom_call.1} parent=0 // pred_region
    _
  $region5: #{tpu_custom_call.1} parent=0 // pred_fallthru
    _
  %v8 = vld [vmem:[%s0] sm:$0xff]
  %v9 = vld [vmem:[%s0 + $0x8] sm:$0xff]
  %v10 = vld [vmem:[%s0 + $0x10] sm:$0xff]
  %v11 = vld [vmem:[%s0 + $0x18] sm:$0xff]
  %v12 = vld [vmem:[%s0 + $0x20] sm:$0xff]
  %v13 = vld [vmem:[%s0 + $0x28] sm:$0xff]
  %v14 = vld [vmem:[%s0 + $0x30] sm:$0xff]
  %v15 = vld [vmem:[%s0 + $0x38] sm:$0xff]
  %v16 = vld [vmem:[%s0 + $0x40] sm:$0xff]
  %v17 = vld [vmem:[%s0 + $0x48] sm:$0xff]
  %v18 = vld [vmem:[%s0 + $0x50] sm:$0xff]
  %v19 = vld [vmem:[%s0 + $0x58] sm:$0xff]
  %v20 = vld [vmem:[%s0 + $0x60] sm:$0xff]
  %v21 = vld [vmem:[%s0 + $0x68] sm:$0xff]
  %v22 = vld [vmem:[%s0 + $0x70] sm:$0xff]
  %v23 = vld [vmem:[%s0 + $0x78] sm:$0xff]
  %vm24 = vcmask 130048
  %25 = vst.msk [vmem:[%s1] sm:$0xff] %vm24, %v8
  %26 = vst.msk [vmem:[%s1 + $0x8] sm:$0xff] %vm24, %v9
  %27 = vst.msk [vmem:[%s1 + $0x10] sm:$0xff] %vm24, %v10
  %28 = vst.msk [vmem:[%s1 + $0x18] sm:$0xff] %vm24, %v11
  %29 = vst.msk [vmem:[%s1 + $0x20] sm:$0xff] %vm24, %v12
  %30 = vst.msk [vmem:[%s1 + $0x28] sm:$0xff] %vm24, %v13
  %31 = vst.msk [vmem:[%s1 + $0x30] sm:$0xff] %vm24, %v14
  %32 = vst.msk [vmem:[%s1 + $0x38] sm:$0xff] %vm24, %v15
  %33 = vst.msk [vmem:[%s1 + $0x40] sm:$0xff] %vm24, %v16
  %34 = vst.msk [vmem:[%s1 + $0x48] sm:$0xff] %vm24, %v17
  %35 = vst.msk [vmem:[%s1 + $0x50] sm:$0xff] %vm24, %v18
  %36 = vst.msk [vmem:[%s1 + $0x58] sm:$0xff] %vm24, %v19
  %37 = vst.msk [vmem:[%s1 + $0x60] sm:$0xff] %vm24, %v20
  %38 = vst.msk [vmem:[%s1 + $0x68] sm:$0xff] %vm24, %v21
  %39 = vst.msk [vmem:[%s1 + $0x70] sm:$0xff] %vm24, %v22
  %40 = vst.msk [vmem:[%s1 + $0x78] sm:$0xff] %vm24, %v23
  // Predicated region
  $region6: #{tpu_custom_call.1} parent=0 // pred_check
    _
  $region7: #{tpu_custom_call.1} parent=0 // pred_check_branch
    %42 = sbr.rel (0) target = $region9
  $region8: #{tpu_custom_call.1} parent=0 // pred_region
    _
  $region9: #{tpu_custom_call.1} parent=0 // pred_fallthru
    _
  // Predicated region
  $region10: #{tpu_custom_call.1} parent=0 // pred_check
    _
  $region11: #{tpu_custom_call.1} parent=0 // pred_check_branch
    %44 = sbr.rel (0) target = $region13
  $region12: #{tpu_custom_call.1} parent=0 // pred_region
    _
  $region13: #{tpu_custom_call.1} parent=0 // pred_fallthru
    _

</llo_original>
